<compile_context>
chip_gen: v7x
topology: tpu7x:2x2x1
jax: 0.10.0
libtpu: 0.0.40
codegen_flags: <defaults>
</compile_context>

<pallas_src>
import functools
import math

import jax
import jax.numpy as jnp
from jax.experimental import pallas as pl
from jax.experimental.pallas import tpu as pltpu


def _round_up(a, m):
    return ((a + m - 1) // m) * m


# ---------------------------------------------------------------------------
# Pallas kernel
# ---------------------------------------------------------------------------
def _multires_fading_kernel(x_ref, h0_ref, h1_ref, w_ref, y_ref, *,
                            depth, kernel_size, seq_len, approx_gelu):
    # x_ref : (R, Lp)  R flattened (batch, channel) rows, lane-dense (Lp%128==0)
    # h0/h1 : (R, K)   per-row depthwise filter banks
    # w     : (R, M)   per-row mixing weights, M = depth + 2
    x = x_ref[...]
    h0 = h0_ref[...]
    h1 = h1_ref[...]
    w = w_ref[...]

    R, Lp = x.shape
    slack = Lp - seq_len          # zero lanes available at the tail (static)

    # Hoist the (R, 1) column slices once (JAX does not CSE them across the
    # unrolled tap/level loops).
    h0_cols = [h0[:, k:k + 1] for k in range(kernel_size)]
    h1_cols = [h1[:, k:k + 1] for k in range(kernel_size)]
    w_cols = [w[:, j:j + 1] for j in range(depth + 2)]

    lane_idx = jax.lax.broadcasted_iota(jnp.int32, (R, Lp), 1)
    # Valid-lane mask, used only to re-zero res_lo's padded tail once per
    # level so the next level's rolls wrap zeros in (mask-free fast path).
    valid = (lane_idx < seq_len) if (depth > 1 and slack > 0) else None

    def shift_right(v, s, tail_is_zero):
        # v[..., t] -> v[..., t - s] with zero fill (== causal left zero-pad).
        if s == 0:
            return v
        rolled = pltpu.roll(v, shift=s, axis=1)
        if tail_is_zero and s <= slack:
            return rolled                      # wrapped-in lanes are zero
        # Fallback for shifts larger than the padding slack: mask the
        # wrapped-in front.  The compare is recomputed at the use site
        # (1 VALU op) instead of cached across the whole unrolled loop.
        return jnp.where(lane_idx >= s, rolled, 0.0)

    res_lo = x                       # wrapper zero-pads the tail of x
    tail_is_zero = True
    y = x * w_cols[depth + 1]        # residual term x * w[:, -1]
    dilation = 1
    for i in range(depth, 0, -1):
        res_hi = None
        new_lo = None
        # Share each shifted input between the h0 and h1 taps: one roll per
        # tap, used by both accumulations.
        for k in range(kernel_size):
            s = (kernel_size - 1 - k) * dilation
            if s >= Lp:
                continue             # dead tap: shift falls off the block
            shifted = shift_right(res_lo, s, tail_is_zero)
            hi = shifted * h1_cols[k]
            lo = shifted * h0_cols[k]
            res_hi = hi if res_hi is None else res_hi + hi
            new_lo = lo if new_lo is None else new_lo + lo
        y = y + w_cols[i] * res_hi
        dilation *= 2
        # Re-zero the padded tail only when the NEXT level still has a tap
        # on the mask-free fast path (its min nonzero shift is `dilation`).
        if i > 1 and valid is not None and dilation <= slack:
            res_lo = jnp.where(valid, new_lo, 0.0)
            tail_is_zero = True
        else:
            res_lo = new_lo
            tail_is_zero = False
    y = y + w_cols[0] * res_lo

    if approx_gelu:
        # tanh-form GELU: tanh is a native EUP op (frees the binding VALU
        # slot) but differs slightly from PyTorch's default exact GELU.
        c = jnp.float32(math.sqrt(2.0 / math.pi))
        y = 0.5 * y * (1.0 + jnp.tanh(c * (y + 0.044715 * y * y * y)))
    else:
        # Exact GELU (PyTorch nn.GELU default, erf form).  Note: lax.erf
        # lowers to a VALU polynomial on TPU, not the EUP.
        inv_sqrt2 = jnp.float32(1.0 / math.sqrt(2.0))
        y = 0.5 * y * (1.0 + jax.lax.erf(y * inv_sqrt2))

    # dropout p=0.0 -> identity
    y_ref[...] = y.astype(y_ref.dtype)


# ---------------------------------------------------------------------------
# Wrapper
# ---------------------------------------------------------------------------
def multires_layer_fading(x, h0, h1, w, *, depth, kernel_size,
                          row_tile=None, approx_gelu=False):
    """x: (B, C, L) float32; h0,h1: (C, 1, K); w: (C, depth+2)."""
    B, C, L = x.shape
    K = kernel_size
    M = w.shape[1]
    assert M == depth + 2, "w must have depth+2 columns for tree_select='fading'"

    # Lane-dense sequence axis: pad L up to a multiple of 128.  Causal conv
    # => outputs at t < L never read the padded tail, so this is exact.
    Lp = max(128, _round_up(L, 128))

    # Generation-aware sizing: per step we hold ~4 double-buffered in/out
    # blocks plus ~6-8 live f32 (R, Lp) temporaries -> budget one block at
    # ~1/20 of physical VMEM (v5e/v6e: 128 MiB, v7x: 64 MiB).
    try:
        vmem_cap = int(pltpu.get_tpu_info().vmem_capacity_bytes)
    except Exception:
        vmem_cap = 64 * 1024 * 1024          # conservative (v7x-sized)
    block_budget = vmem_cap // 20

    rows = B * C
    if row_tile is None:
        budget_rows = max(8, (block_budget // (4 * Lp)) // 8 * 8)
        # Prefer >= ~8 grid steps (pipelining + megacore) when rows allow.
        pref_rows = max(8, _round_up(pl.cdiv(rows, 8), 8))
        R = min(budget_rows, pref_rows)
    else:
        R = max(8, _round_up(row_tile, 8))
    R = min(R, _round_up(rows, 8))
    rows_pad = _round_up(rows, R)
    n_blocks = rows_pad // R

    # Flatten (B, C) -> rows and replicate the per-channel filters / mixing
    # weights to one row per (b, c) so row blocks may cut across batches.
    x2 = jnp.pad(x, ((0, 0), (0, 0), (0, Lp - L))).reshape(rows, Lp)
    x2 = jnp.pad(x2, ((0, rows_pad - rows), (0, 0)))
    h0_rows = jnp.pad(jnp.tile(h0[:, 0, :], (B, 1)),
                      ((0, rows_pad - rows), (0, 0)))
    h1_rows = jnp.pad(jnp.tile(h1[:, 0, :], (B, 1)),
                      ((0, rows_pad - rows), (0, 0)))
    w_rows = jnp.pad(jnp.tile(w, (B, 1)), ((0, rows_pad - rows), (0, 0)))

    block_bytes = R * Lp * 4
    vmem_limit = int(min(0.75 * vmem_cap,
                         max(32 * 1024 * 1024, 16 * block_bytes)))

    kernel = functools.partial(_multires_fading_kernel,
                               depth=depth, kernel_size=K, seq_len=L,
                               approx_gelu=approx_gelu)
    y2 = pl.pallas_call(
        kernel,
        out_shape=jax.ShapeDtypeStruct((rows_pad, Lp), x.dtype),
        grid=(n_blocks,),
        in_specs=[
            pl.BlockSpec((R, Lp), lambda r: (r, 0)),   # x rows of this block
            pl.BlockSpec((R, K), lambda r: (r, 0)),    # h0 rows
            pl.BlockSpec((R, K), lambda r: (r, 0)),    # h1 rows
            pl.BlockSpec((R, M), lambda r: (r, 0)),    # w rows
        ],
        out_specs=pl.BlockSpec((R, Lp), lambda r: (r, 0)),
        compiler_params=pltpu.CompilerParams(
            dimension_semantics=("parallel",),         # shards across TCs
            vmem_limit_bytes=vmem_limit),
    )(x2, h0_rows, h1_rows, w_rows)

    # TODO(synk): in a multi-layer model, keep activations in the padded
    # (rows, Lp) layout across layers to avoid this pad/slice HBM round trip.
    return y2[:rows].reshape(B, C, Lp)[:, :, :L]


# ---------------------------------------------------------------------------
# Pure-JAX reference (mirrors the PyTorch forward_fading + GELU exactly)
# ---------------------------------------------------------------------------
def _ref_depthwise_conv1d(x, h, dilation):
    C, K = h.shape
    return jax.lax.conv_general_dilated(
        x, h[:, None, :],
        window_strides=(1,), padding=[(0, 0)],
        rhs_dilation=(dilation,),
        dimension_numbers=("NCH", "OIH", "NCH"),
        feature_group_count=C)


def ref_multires_fading(x, h0, h1, w, depth, kernel_size):
    h0_2d = h0[:, 0, :]
    h1_2d = h1[:, 0, :]
    res_lo = x
    y = jnp.zeros_like(x)
    dilation = 1
    for i in range(depth, 0, -1):
        pad = dilation * (kernel_size - 1)
        xp = jnp.pad(res_lo, ((0, 0), (0, 0), (pad, 0)))
        res_hi = _ref_depthwise_conv1d(xp, h1_2d, dilation)
        res_lo = _ref_depthwise_conv1d(xp, h0_2d, dilation)
        y = y + w[:, i:i + 1] * res_hi
        dilation *= 2
    y = y + w[:, :1] * res_lo
    y = y + x * w[:, -1:]
    return 0.5 * y * (1.0 + jax.scipy.special.erf(y / jnp.sqrt(2.0)))


# ---------------------------------------------------------------------------
# Main
# ---------------------------------------------------------------------------
if __name__ == "__main__":
    # Module config (tree_select='fading', dropout=0.0)
    d_model = 16
    kernel_size = 4
    seq_len = 64
    batch = 2
    # depth = max_depth(seq_len) as in the module
    depth = math.ceil(math.log2((seq_len - 1) / (kernel_size - 1) + 1))  # -> 5
    m = depth + 1  # fading

    # Deterministic parameter init (same shapes/scales as the module __init__)
    key = jax.random.PRNGKey(0)
    k_h0, k_h1, k_w, k_x = jax.random.split(key, 4)
    h_scale = math.sqrt(2.0 / (kernel_size * 2))
    h0 = jax.random.uniform(k_h0, (d_model, 1, kernel_size),
                            minval=-1.0, maxval=1.0) * h_scale
    h1 = jax.random.uniform(k_h1, (d_model, 1, kernel_size),
                            minval=-1.0, maxval=1.0) * h_scale
    w = jax.random.uniform(k_w, (d_model, m + 1),
                           minval=-1.0, maxval=1.0) * math.sqrt(2.0 / (2 * m + 2))

    x = jax.random.normal(k_x, (batch, d_model, seq_len), dtype=jnp.float32)

    y = multires_layer_fading(x, h0, h1, w, depth=depth,
                              kernel_size=kernel_size)
    y = jax.block_until_ready(y)

    y_ref = jax.block_until_ready(
        ref_multires_fading(x, h0, h1, w, depth, kernel_size))

    err = float(jnp.max(jnp.abs(y - y_ref)))
    assert err < 2e-4, f"mismatch vs reference: max abs err = {err}"
    print("KERNEL_OK")
</pallas_src>

<mosaic_0001>
module attributes {stable_mosaic.version = 11 : i64} {
  func.func @_multires_fading_kernel(%arg0: i32, %arg1: memref<8x128xf32, #tpu.memory_space<vmem>>, %arg2: memref<8x4xf32, #tpu.memory_space<vmem>>, %arg3: memref<8x4xf32, #tpu.memory_space<vmem>>, %arg4: memref<8x7xf32, #tpu.memory_space<vmem>>, %arg5: memref<8x128xf32, #tpu.memory_space<vmem>>) attributes {dimension_semantics = [#tpu.dimension_semantics<parallel>], iteration_bounds = array<i64: 4>, scalar_prefetch = 0 : i64, scratch_operands = 0 : i64, tpu.core_type = #tpu.core_type<tc>, window_params = [{transform_indices = @transform_0, window_bounds = array<i64: 8, 128>}, {transform_indices = @transform_1, window_bounds = array<i64: 8, 4>}, {transform_indices = @transform_2, window_bounds = array<i64: 8, 4>}, {transform_indices = @transform_3, window_bounds = array<i64: 8, 7>}, {transform_indices = @transform_4, window_bounds = array<i64: 8, 128>}]} {
    %c0 = arith.constant 0 : index
    %c0_0 = arith.constant 0 : index
    %0 = vector.load %arg1[%c0, %c0_0] : memref<8x128xf32, #tpu.memory_space<vmem>>, vector<8x128xf32>
    %c0_1 = arith.constant 0 : index
    %c0_2 = arith.constant 0 : index
    %1 = vector.load %arg2[%c0_1, %c0_2] : memref<8x4xf32, #tpu.memory_space<vmem>>, vector<8x4xf32>
    %c0_3 = arith.constant 0 : index
    %c0_4 = arith.constant 0 : index
    %2 = vector.load %arg3[%c0_3, %c0_4] : memref<8x4xf32, #tpu.memory_space<vmem>>, vector<8x4xf32>
    %c0_5 = arith.constant 0 : index
    %c0_6 = arith.constant 0 : index
    %3 = vector.load %arg4[%c0_5, %c0_6] : memref<8x7xf32, #tpu.memory_space<vmem>>, vector<8x7xf32>
    %4 = vector.extract_strided_slice %1 {offsets = [0, 0], sizes = [8, 1], strides = [1, 1]} : vector<8x4xf32> to vector<8x1xf32>
    %5 = vector.extract_strided_slice %1 {offsets = [0, 1], sizes = [8, 1], strides = [1, 1]} : vector<8x4xf32> to vector<8x1xf32>
    %6 = vector.extract_strided_slice %1 {offsets = [0, 2], sizes = [8, 1], strides = [1, 1]} : vector<8x4xf32> to vector<8x1xf32>
    %7 = vector.extract_strided_slice %1 {offsets = [0, 3], sizes = [8, 1], strides = [1, 1]} : vector<8x4xf32> to vector<8x1xf32>
    %8 = vector.extract_strided_slice %2 {offsets = [0, 0], sizes = [8, 1], strides = [1, 1]} : vector<8x4xf32> to vector<8x1xf32>
    %9 = vector.extract_strided_slice %2 {offsets = [0, 1], sizes = [8, 1], strides = [1, 1]} : vector<8x4xf32> to vector<8x1xf32>
    %10 = vector.extract_strided_slice %2 {offsets = [0, 2], sizes = [8, 1], strides = [1, 1]} : vector<8x4xf32> to vector<8x1xf32>
    %11 = vector.extract_strided_slice %2 {offsets = [0, 3], sizes = [8, 1], strides = [1, 1]} : vector<8x4xf32> to vector<8x1xf32>
    %12 = vector.extract_strided_slice %3 {offsets = [0, 0], sizes = [8, 1], strides = [1, 1]} : vector<8x7xf32> to vector<8x1xf32>
    %13 = vector.extract_strided_slice %3 {offsets = [0, 1], sizes = [8, 1], strides = [1, 1]} : vector<8x7xf32> to vector<8x1xf32>
    %14 = vector.extract_strided_slice %3 {offsets = [0, 2], sizes = [8, 1], strides = [1, 1]} : vector<8x7xf32> to vector<8x1xf32>
    %15 = vector.extract_strided_slice %3 {offsets = [0, 3], sizes = [8, 1], strides = [1, 1]} : vector<8x7xf32> to vector<8x1xf32>
    %16 = vector.extract_strided_slice %3 {offsets = [0, 4], sizes = [8, 1], strides = [1, 1]} : vector<8x7xf32> to vector<8x1xf32>
    %17 = vector.extract_strided_slice %3 {offsets = [0, 5], sizes = [8, 1], strides = [1, 1]} : vector<8x7xf32> to vector<8x1xf32>
    %18 = vector.extract_strided_slice %3 {offsets = [0, 6], sizes = [8, 1], strides = [1, 1]} : vector<8x7xf32> to vector<8x1xf32>
    %19 = tpu.iota {dimensions = array<i32: 1>} : vector<8x128xi32>
    %c64_i32 = arith.constant 64 : i32
    %20 = vector.broadcast %c64_i32 : i32 to vector<8x128xi32>
    %21 = arith.cmpi slt, %19, %20 : vector<8x128xi32>
    %22 = vector.broadcast %18 : vector<8x1xf32> to vector<8x128xf32>
    %23 = arith.mulf %0, %22 : vector<8x128xf32>
    %c3_i32 = arith.constant 3 : i32
    %24 = tpu.dynamic_rotate %0 by %c3_i32 dim 1 : vector<8x128xf32>, i32 -> vector<8x128xf32>
    %25 = vector.broadcast %8 : vector<8x1xf32> to vector<8x128xf32>
    %26 = arith.mulf %24, %25 : vector<8x128xf32>
    %27 = vector.broadcast %4 : vector<8x1xf32> to vector<8x128xf32>
    %28 = arith.mulf %24, %27 : vector<8x128xf32>
    %c2_i32 = arith.constant 2 : i32
    %29 = tpu.dynamic_rotate %0 by %c2_i32 dim 1 : vector<8x128xf32>, i32 -> vector<8x128xf32>
    %30 = vector.broadcast %9 : vector<8x1xf32> to vector<8x128xf32>
    %31 = arith.mulf %29, %30 : vector<8x128xf32>
    %32 = vector.broadcast %5 : vector<8x1xf32> to vector<8x128xf32>
    %33 = arith.mulf %29, %32 : vector<8x128xf32>
    %34 = arith.addf %26, %31 : vector<8x128xf32>
    %35 = arith.addf %28, %33 : vector<8x128xf32>
    %c1_i32 = arith.constant 1 : i32
    %36 = tpu.dynamic_rotate %0 by %c1_i32 dim 1 : vector<8x128xf32>, i32 -> vector<8x128xf32>
    %37 = vector.broadcast %10 : vector<8x1xf32> to vector<8x128xf32>
    %38 = arith.mulf %36, %37 : vector<8x128xf32>
    %39 = vector.broadcast %6 : vector<8x1xf32> to vector<8x128xf32>
    %40 = arith.mulf %36, %39 : vector<8x128xf32>
    %41 = arith.addf %34, %38 : vector<8x128xf32>
    %42 = arith.addf %35, %40 : vector<8x128xf32>
    %43 = vector.broadcast %11 : vector<8x1xf32> to vector<8x128xf32>
    %44 = arith.mulf %0, %43 : vector<8x128xf32>
    %45 = vector.broadcast %7 : vector<8x1xf32> to vector<8x128xf32>
    %46 = arith.mulf %0, %45 : vector<8x128xf32>
    %47 = arith.addf %41, %44 : vector<8x128xf32>
    %48 = arith.addf %42, %46 : vector<8x128xf32>
    %49 = vector.broadcast %17 : vector<8x1xf32> to vector<8x128xf32>
    %50 = arith.mulf %49, %47 : vector<8x128xf32>
    %51 = arith.addf %23, %50 : vector<8x128xf32>
    %cst = arith.constant 0.000000e+00 : f32
    %52 = vector.broadcast %cst : f32 to vector<8x128xf32>
    %53 = arith.select %21, %48, %52 : vector<8x128xi1>, vector<8x128xf32>
    %c6_i32 = arith.constant 6 : i32
    %54 = tpu.dynamic_rotate %53 by %c6_i32 dim 1 : vector<8x128xf32>, i32 -> vector<8x128xf32>
    %55 = vector.broadcast %8 : vector<8x1xf32> to vector<8x128xf32>
    %56 = arith.mulf %54, %55 : vector<8x128xf32>
    %57 = vector.broadcast %4 : vector<8x1xf32> to vector<8x128xf32>
    %58 = arith.mulf %54, %57 : vector<8x128xf32>
    %c4_i32 = arith.constant 4 : i32
    %59 = tpu.dynamic_rotate %53 by %c4_i32 dim 1 : vector<8x128xf32>, i32 -> vector<8x128xf32>
    %60 = vector.broadcast %9 : vector<8x1xf32> to vector<8x128xf32>
    %61 = arith.mulf %59, %60 : vector<8x128xf32>
    %62 = vector.broadcast %5 : vector<8x1xf32> to vector<8x128xf32>
    %63 = arith.mulf %59, %62 : vector<8x128xf32>
    %64 = arith.addf %56, %61 : vector<8x128xf32>
    %65 = arith.addf %58, %63 : vector<8x128xf32>
    %c2_i32_7 = arith.constant 2 : i32
    %66 = tpu.dynamic_rotate %53 by %c2_i32_7 dim 1 : vector<8x128xf32>, i32 -> vector<8x128xf32>
    %67 = vector.broadcast %10 : vector<8x1xf32> to vector<8x128xf32>
    %68 = arith.mulf %66, %67 : vector<8x128xf32>
    %69 = vector.broadcast %6 : vector<8x1xf32> to vector<8x128xf32>
    %70 = arith.mulf %66, %69 : vector<8x128xf32>
    %71 = arith.addf %64, %68 : vector<8x128xf32>
    %72 = arith.addf %65, %70 : vector<8x128xf32>
    %73 = vector.broadcast %11 : vector<8x1xf32> to vector<8x128xf32>
    %74 = arith.mulf %53, %73 : vector<8x128xf32>
    %75 = vector.broadcast %7 : vector<8x1xf32> to vector<8x128xf32>
    %76 = arith.mulf %53, %75 : vector<8x128xf32>
    %77 = arith.addf %71, %74 : vector<8x128xf32>
    %78 = arith.addf %72, %76 : vector<8x128xf32>
    %79 = vector.broadcast %16 : vector<8x1xf32> to vector<8x128xf32>
    %80 = arith.mulf %79, %77 : vector<8x128xf32>
    %81 = arith.addf %51, %80 : vector<8x128xf32>
    %cst_8 = arith.constant 0.000000e+00 : f32
    %82 = vector.broadcast %cst_8 : f32 to vector<8x128xf32>
    %83 = arith.select %21, %78, %82 : vector<8x128xi1>, vector<8x128xf32>
    %c12_i32 = arith.constant 12 : i32
    %84 = tpu.dynamic_rotate %83 by %c12_i32 dim 1 : vector<8x128xf32>, i32 -> vector<8x128xf32>
    %85 = vector.broadcast %8 : vector<8x1xf32> to vector<8x128xf32>
    %86 = arith.mulf %84, %85 : vector<8x128xf32>
    %87 = vector.broadcast %4 : vector<8x1xf32> to vector<8x128xf32>
    %88 = arith.mulf %84, %87 : vector<8x128xf32>
    %c8_i32 = arith.constant 8 : i32
    %89 = tpu.dynamic_rotate %83 by %c8_i32 dim 1 : vector<8x128xf32>, i32 -> vector<8x128xf32>
    %90 = vector.broadcast %9 : vector<8x1xf32> to vector<8x128xf32>
    %91 = arith.mulf %89, %90 : vector<8x128xf32>
    %92 = vector.broadcast %5 : vector<8x1xf32> to vector<8x128xf32>
    %93 = arith.mulf %89, %92 : vector<8x128xf32>
    %94 = arith.addf %86, %91 : vector<8x128xf32>
    %95 = arith.addf %88, %93 : vector<8x128xf32>
    %c4_i32_9 = arith.constant 4 : i32
    %96 = tpu.dynamic_rotate %83 by %c4_i32_9 dim 1 : vector<8x128xf32>, i32 -> vector<8x128xf32>
    %97 = vector.broadcast %10 : vector<8x1xf32> to vector<8x128xf32>
    %98 = arith.mulf %96, %97 : vector<8x128xf32>
    %99 = vector.broadcast %6 : vector<8x1xf32> to vector<8x128xf32>
    %100 = arith.mulf %96, %99 : vector<8x128xf32>
    %101 = arith.addf %94, %98 : vector<8x128xf32>
    %102 = arith.addf %95, %100 : vector<8x128xf32>
    %103 = vector.broadcast %11 : vector<8x1xf32> to vector<8x128xf32>
    %104 = arith.mulf %83, %103 : vector<8x128xf32>
    %105 = vector.broadcast %7 : vector<8x1xf32> to vector<8x128xf32>
    %106 = arith.mulf %83, %105 : vector<8x128xf32>
    %107 = arith.addf %101, %104 : vector<8x128xf32>
    %108 = arith.addf %102, %106 : vector<8x128xf32>
    %109 = vector.broadcast %15 : vector<8x1xf32> to vector<8x128xf32>
    %110 = arith.mulf %109, %107 : vector<8x128xf32>
    %111 = arith.addf %81, %110 : vector<8x128xf32>
    %cst_10 = arith.constant 0.000000e+00 : f32
    %112 = vector.broadcast %cst_10 : f32 to vector<8x128xf32>
    %113 = arith.select %21, %108, %112 : vector<8x128xi1>, vector<8x128xf32>
    %c24_i32 = arith.constant 24 : i32
    %114 = tpu.dynamic_rotate %113 by %c24_i32 dim 1 : vector<8x128xf32>, i32 -> vector<8x128xf32>
    %115 = vector.broadcast %8 : vector<8x1xf32> to vector<8x128xf32>
    %116 = arith.mulf %114, %115 : vector<8x128xf32>
    %117 = vector.broadcast %4 : vector<8x1xf32> to vector<8x128xf32>
    %118 = arith.mulf %114, %117 : vector<8x128xf32>
    %c16_i32 = arith.constant 16 : i32
    %119 = tpu.dynamic_rotate %113 by %c16_i32 dim 1 : vector<8x128xf32>, i32 -> vector<8x128xf32>
    %120 = vector.broadcast %9 : vector<8x1xf32> to vector<8x128xf32>
    %121 = arith.mulf %119, %120 : vector<8x128xf32>
    %122 = vector.broadcast %5 : vector<8x1xf32> to vector<8x128xf32>
    %123 = arith.mulf %119, %122 : vector<8x128xf32>
    %124 = arith.addf %116, %121 : vector<8x128xf32>
    %125 = arith.addf %118, %123 : vector<8x128xf32>
    %c8_i32_11 = arith.constant 8 : i32
    %126 = tpu.dynamic_rotate %113 by %c8_i32_11 dim 1 : vector<8x128xf32>, i32 -> vector<8x128xf32>
    %127 = vector.broadcast %10 : vector<8x1xf32> to vector<8x128xf32>
    %128 = arith.mulf %126, %127 : vector<8x128xf32>
    %129 = vector.broadcast %6 : vector<8x1xf32> to vector<8x128xf32>
    %130 = arith.mulf %126, %129 : vector<8x128xf32>
    %131 = arith.addf %124, %128 : vector<8x128xf32>
    %132 = arith.addf %125, %130 : vector<8x128xf32>
    %133 = vector.broadcast %11 : vector<8x1xf32> to vector<8x128xf32>
    %134 = arith.mulf %113, %133 : vector<8x128xf32>
    %135 = vector.broadcast %7 : vector<8x1xf32> to vector<8x128xf32>
    %136 = arith.mulf %113, %135 : vector<8x128xf32>
    %137 = arith.addf %131, %134 : vector<8x128xf32>
    %138 = arith.addf %132, %136 : vector<8x128xf32>
    %139 = vector.broadcast %14 : vector<8x1xf32> to vector<8x128xf32>
    %140 = arith.mulf %139, %137 : vector<8x128xf32>
    %141 = arith.addf %111, %140 : vector<8x128xf32>
    %cst_12 = arith.constant 0.000000e+00 : f32
    %142 = vector.broadcast %cst_12 : f32 to vector<8x128xf32>
    %143 = arith.select %21, %138, %142 : vector<8x128xi1>, vector<8x128xf32>
    %c48_i32 = arith.constant 48 : i32
    %144 = tpu.dynamic_rotate %143 by %c48_i32 dim 1 : vector<8x128xf32>, i32 -> vector<8x128xf32>
    %145 = vector.broadcast %8 : vector<8x1xf32> to vector<8x128xf32>
    %146 = arith.mulf %144, %145 : vector<8x128xf32>
    %147 = vector.broadcast %4 : vector<8x1xf32> to vector<8x128xf32>
    %148 = arith.mulf %144, %147 : vector<8x128xf32>
    %c32_i32 = arith.constant 32 : i32
    %149 = tpu.dynamic_rotate %143 by %c32_i32 dim 1 : vector<8x128xf32>, i32 -> vector<8x128xf32>
    %150 = vector.broadcast %9 : vector<8x1xf32> to vector<8x128xf32>
    %151 = arith.mulf %149, %150 : vector<8x128xf32>
    %152 = vector.broadcast %5 : vector<8x1xf32> to vector<8x128xf32>
    %153 = arith.mulf %149, %152 : vector<8x128xf32>
    %154 = arith.addf %146, %151 : vector<8x128xf32>
    %155 = arith.addf %148, %153 : vector<8x128xf32>
    %c16_i32_13 = arith.constant 16 : i32
    %156 = tpu.dynamic_rotate %143 by %c16_i32_13 dim 1 : vector<8x128xf32>, i32 -> vector<8x128xf32>
    %157 = vector.broadcast %10 : vector<8x1xf32> to vector<8x128xf32>
    %158 = arith.mulf %156, %157 : vector<8x128xf32>
    %159 = vector.broadcast %6 : vector<8x1xf32> to vector<8x128xf32>
    %160 = arith.mulf %156, %159 : vector<8x128xf32>
    %161 = arith.addf %154, %158 : vector<8x128xf32>
    %162 = arith.addf %155, %160 : vector<8x128xf32>
    %163 = vector.broadcast %11 : vector<8x1xf32> to vector<8x128xf32>
    %164 = arith.mulf %143, %163 : vector<8x128xf32>
    %165 = vector.broadcast %7 : vector<8x1xf32> to vector<8x128xf32>
    %166 = arith.mulf %143, %165 : vector<8x128xf32>
    %167 = arith.addf %161, %164 : vector<8x128xf32>
    %168 = arith.addf %162, %166 : vector<8x128xf32>
    %169 = vector.broadcast %13 : vector<8x1xf32> to vector<8x128xf32>
    %170 = arith.mulf %169, %167 : vector<8x128xf32>
    %171 = arith.addf %141, %170 : vector<8x128xf32>
    %172 = vector.broadcast %12 : vector<8x1xf32> to vector<8x128xf32>
    %173 = arith.mulf %172, %168 : vector<8x128xf32>
    %174 = arith.addf %171, %173 : vector<8x128xf32>
    %cst_14 = arith.constant 5.000000e-01 : f32
    %175 = vector.broadcast %cst_14 : f32 to vector<8x128xf32>
    %176 = arith.mulf %175, %174 : vector<8x128xf32>
    %cst_15 = arith.constant 0.707106769 : f32
    %177 = vector.broadcast %cst_15 : f32 to vector<8x128xf32>
    %178 = arith.mulf %174, %177 : vector<8x128xf32>
    %179 = math.erf %178 : vector<8x128xf32>
    %cst_16 = arith.constant 1.000000e+00 : f32
    %180 = vector.broadcast %cst_16 : f32 to vector<8x128xf32>
    %181 = arith.addf %180, %179 : vector<8x128xf32>
    %182 = arith.mulf %176, %181 : vector<8x128xf32>
    %c0_17 = arith.constant 0 : index
    %c0_18 = arith.constant 0 : index
    %183 = vector.load %arg5[%c0_17, %c0_18] : memref<8x128xf32, #tpu.memory_space<vmem>>, vector<8x128xf32>
    tpu.vector_store %arg5[%c0_17, %c0_18], %182 {strides = array<i32>} : memref<8x128xf32, #tpu.memory_space<vmem>>, vector<8x128xf32>,
    return
  }
  func.func @transform_0(%arg0: i32) -> (i32, i32) {
    %c0_i32 = arith.constant 0 : i32
    %c0_i32_0 = arith.constant 0 : i32
    return %arg0, %c0_i32 : i32, i32
  }
  func.func @transform_1(%arg0: i32) -> (i32, i32) {
    %c0_i32 = arith.constant 0 : i32
    %c0_i32_0 = arith.constant 0 : i32
    return %arg0, %c0_i32 : i32, i32
  }
  func.func @transform_2(%arg0: i32) -> (i32, i32) {
    %c0_i32 = arith.constant 0 : i32
    %c0_i32_0 = arith.constant 0 : i32
    return %arg0, %c0_i32 : i32, i32
  }
  func.func @transform_3(%arg0: i32) -> (i32, i32) {
    %c0_i32 = arith.constant 0 : i32
    %c0_i32_0 = arith.constant 0 : i32
    return %arg0, %c0_i32 : i32, i32
  }
  func.func @transform_4(%arg0: i32) -> (i32, i32) {
    %c0_i32 = arith.constant 0 : i32
    %c0_i32_0 = arith.constant 0 : i32
    return %arg0, %c0_i32 : i32, i32
  }
}

</mosaic_0001>

<llo_original>
// kernel: tpu_custom_call.1
$region0: #{tpu_custom_call.1}
  #allocation0 [shape = 'u32[]', space=smem, size = 0x4, offset = 0x4, fixed_abs, tag = 'smem constant byte address 0x4 - core index']
  #allocation1 [shape = 'u32[144,128]{1,0:T(1,128)}', space=vmem, size = 0x12000, scoped, tag = 'internal scratch']
  %s0 = inlined_call_operand.vmem [shape: f32[32,128], index: 0, kind: input, shape index: {}]
  %s1 = inlined_call_operand.vmem [shape: f32[32,4], index: 1, kind: input, shape index: {}]
  %s2 = inlined_call_operand.vmem [shape: f32[32,4], index: 2, kind: input, shape index: {}]
  %s3 = inlined_call_operand.vmem [shape: f32[32,7], index: 3, kind: input, shape index: {}]
  %s4 = inlined_call_operand.hbm [shape: f32[32,128], index: 4, kind: output, shape index: {}]
  %s5 = sld [smem:[#allocation0]]
  $region49: #{tpu_custom_call.1} parent=0
    _
  %s7 = ssub.s32 1, %s5
  %s8 = scalar_select 0, %s7, %s5
  $region1: #{tpu_custom_call.1} parent=0
    #allocation2 [shape = 'u8[8192]{0}', space=vmem, size = 0x2000, scoped, tag = 'output window, operand 0']
    #allocation3 [shape = 's32[2]{0}', space=sflag, size = 0x8, scoped, tag = 'scoped memory for tpu_custom_call.1']
    %9 = vsyncpa [#allocation3], 0
    %s10 = scalar_lea.sflag [#allocation3], 1
    %11 = vsyncpa %s10, 0
    loop: start=0, step=1, limit=6
    $region2: #{tpu_custom_call.1} parent=1 // loop_pre_header
      _
    $region3: #{tpu_custom_call.1} parent=1 // loop_header
      %s13 = sphi 0, %s17
      %p14 = scmp.ge.s32.totalorder %s13, 6
      %s23 = sphi 0, %s25
      %s26 = sphi 0, %s23
      %s27 = sphi 0, %s26
      %s43 = sphi 0, %s27
      %s49 = sphi 0, %s51
      %s52 = sphi 0, %s49
      %s53 = sphi 0, %s52
      %s69 = sphi 0, %s53
      %s75 = sphi 0, %s77
      %s78 = sphi 0, %s75
      %s79 = sphi 0, %s78
      %s95 = sphi 0, %s79
      %s101 = sphi 0, %s103
      %s104 = sphi 0, %s101
      %s105 = sphi 0, %s104
      %s121 = sphi 0, %s105
      %s127 = sphi 0, %s129
      %s130 = sphi 0, %s127
      %s131 = sphi 0, %s130
      %s147 = sphi 0, %s131
    $region4: #{tpu_custom_call.1} parent=1 // loop_header_branch
      %16 = sbr.rel (%p14) target = $region8
    $region5: #{tpu_custom_call.1} parent=1 // loop_body
      %s18 = ssub.s32 %s13, 1
      %s19 = ssub.s32 %s13, 2
      %s20 = sadd.s32 %s13, 1
      %s21 = ssub.s32 %s13, %s20
      %p22 = scmp.eq.s32.totalorder %s21, 0
      %s24 = sadd.s32 %s23, 1
      %s25 = scalar_select %p22, %s23, %s24
      %p28 = pneg %p22
      %p29 = scmp.eq.s32.totalorder %s13, 3
      %p30 = por %p28, %p29
      %p31 = scmp.ne.s32.totalorder %s23, %s26
      %p32 = scmp.eq.s32.totalorder %s13, 0
      %p33 = por %p31, %p32
      %p34 = scmp.ne.s32.totalorder %s23, %s26
      %p35 = scmp.eq.s32.totalorder %s18, 3
      %p36 = por %p34, %p35
      %p37 = scmp.ne.s32.totalorder %s26, %s27
      %p38 = scmp.eq.s32.totalorder %s18, 0
      %p39 = por %p37, %p38
      %p40 = scmp.ne.s32.totalorder %s26, %s27
      %p41 = scmp.eq.s32.totalorder %s19, 3
      %p42 = por %p40, %p41
      %p44 = scmp.ne.s32.totalorder %s27, %s43
      %p45 = scmp.eq.s32.totalorder %s19, 0
      %p46 = por %p44, %p45
      %s47 = ssub.s32 %s13, %s20
      %p48 = scmp.eq.s32.totalorder %s47, 0
      %s50 = sadd.s32 %s49, 1
      %s51 = scalar_select %p48, %s49, %s50
      %p54 = pneg %p48
      %p55 = scmp.eq.s32.totalorder %s13, 3
      %p56 = por %p54, %p55
      %p57 = scmp.ne.s32.totalorder %s49, %s52
      %p58 = scmp.eq.s32.totalorder %s13, 0
      %p59 = por %p57, %p58
      %p60 = scmp.ne.s32.totalorder %s49, %s52
      %p61 = scmp.eq.s32.totalorder %s18, 3
      %p62 = por %p60, %p61
      %p63 = scmp.ne.s32.totalorder %s52, %s53
      %p64 = scmp.eq.s32.totalorder %s18, 0
      %p65 = por %p63, %p64
      %p66 = scmp.ne.s32.totalorder %s52, %s53
      %p67 = scmp.eq.s32.totalorder %s19, 3
      %p68 = por %p66, %p67
      %p70 = scmp.ne.s32.totalorder %s53, %s69
      %p71 = scmp.eq.s32.totalorder %s19, 0
      %p72 = por %p70, %p71
      %s73 = ssub.s32 %s13, %s20
      %p74 = scmp.eq.s32.totalorder %s73, 0
      %s76 = sadd.s32 %s75, 1
      %s77 = scalar_select %p74, %s75, %s76
      %p80 = pneg %p74
      %p81 = scmp.eq.s32.totalorder %s13, 3
      %p82 = por %p80, %p81
      %p83 = scmp.ne.s32.totalorder %s75, %s78
      %p84 = scmp.eq.s32.totalorder %s13, 0
      %p85 = por %p83, %p84
      %p86 = scmp.ne.s32.totalorder %s75, %s78
      %p87 = scmp.eq.s32.totalorder %s18, 3
      %p88 = por %p86, %p87
      %p89 = scmp.ne.s32.totalorder %s78, %s79
      %p90 = scmp.eq.s32.totalorder %s18, 0
      %p91 = por %p89, %p90
      %p92 = scmp.ne.s32.totalorder %s78, %s79
      %p93 = scmp.eq.s32.totalorder %s19, 3
      %p94 = por %p92, %p93
      %p96 = scmp.ne.s32.totalorder %s79, %s95
      %p97 = scmp.eq.s32.totalorder %s19, 0
      %p98 = por %p96, %p97
      %s99 = ssub.s32 %s13, %s20
      %p100 = scmp.eq.s32.totalorder %s99, 0
      %s102 = sadd.s32 %s101, 1
      %s103 = scalar_select %p100, %s101, %s102
      %p106 = pneg %p100
      %p107 = scmp.eq.s32.totalorder %s13, 3
      %p108 = por %p106, %p107
      %p109 = scmp.ne.s32.totalorder %s101, %s104
      %p110 = scmp.eq.s32.totalorder %s13, 0
      %p111 = por %p109, %p110
      %p112 = scmp.ne.s32.totalorder %s101, %s104
      %p113 = scmp.eq.s32.totalorder %s18, 3
      %p114 = por %p112, %p113
      %p115 = scmp.ne.s32.totalorder %s104, %s105
      %p116 = scmp.eq.s32.totalorder %s18, 0
      %p117 = por %p115, %p116
      %p118 = scmp.ne.s32.totalorder %s104, %s105
      %p119 = scmp.eq.s32.totalorder %s19, 3
      %p120 = por %p118, %p119
      %p122 = scmp.ne.s32.totalorder %s105, %s121
      %p123 = scmp.eq.s32.totalorder %s19, 0
      %p124 = por %p122, %p123
      %s125 = ssub.s32 %s13, %s20
      %p126 = scmp.eq.s32.totalorder %s125, 0
      %s128 = sadd.s32 %s127, 1
      %s129 = scalar_select %p126, %s127, %s128
      %p132 = pneg %p126
      %p133 = scmp.eq.s32.totalorder %s13, 3
      %p134 = por %p132, %p133
      %p135 = scmp.ne.s32.totalorder %s127, %s130
      %p136 = scmp.eq.s32.totalorder %s13, 0
      %p137 = por %p135, %p136
      %p138 = scmp.ne.s32.totalorder %s127, %s130
      %p139 = scmp.eq.s32.totalorder %s18, 3
      %p140 = por %p138, %p139
      %p141 = scmp.ne.s32.totalorder %s130, %s131
      %p142 = scmp.eq.s32.totalorder %s18, 0
      %p143 = por %p141, %p142
      %p144 = scmp.ne.s32.totalorder %s130, %s131
      %p145 = scmp.eq.s32.totalorder %s19, 3
      %p146 = por %p144, %p145
      %p148 = scmp.ne.s32.totalorder %s131, %s147
      %p149 = scmp.eq.s32.totalorder %s19, 0
      %p150 = por %p148, %p149
      %p151 = scmp.le.s32.totalorder 1, %s13
      %p152 = scmp.lt.s32.totalorder %s13, 5
      %p153 = pnand %p151, %p152
      %p154 = pneg %p153
      // Predicated region
      $region9: #{tpu_custom_call.1} parent=5 // pred_check
        _
      $region10: #{tpu_custom_call.1} parent=5 // pred_check_branch
        %156 = sbr.rel (%p153) target = $region12
      $region11: #{tpu_custom_call.1} parent=5 // pred_region
        %s157 = ssub.s32 %s13, 1
      $region12: #{tpu_custom_call.1} parent=5 // pred_fallthru
        _
      %p158 = scmp.lt.s32.totalorder %s13, 4
      // Predicated region
      $region13: #{tpu_custom_call.1} parent=5 // pred_check
        %p159 = pneg %p158
      $region14: #{tpu_custom_call.1} parent=5 // pred_check_branch
        %161 = sbr.rel (%p159) target = $region16
      $region15: #{tpu_custom_call.1} parent=5 // pred_region
        // Predicated region
        $region17: #{tpu_custom_call.1} parent=15 // pred_check
          %p162 = pneg %p33
        $region18: #{tpu_custom_call.1} parent=15 // pred_check_branch
          %164 = sbr.rel (%p162) target = $region20
        $region19: #{tpu_custom_call.1} parent=15 // pred_region
          %p165 = scmp.lt.s32.totalorder %s13, 3
          %s166 = scalar_select %p165, %s13, 3
          %s167 = smul.addr %s166, 8
          %s168 = scalar_lea.vmem %s0, %s167
        $region20: #{tpu_custom_call.1} parent=15 // pred_fallthru
          _
        // Predicated region
        $region21: #{tpu_custom_call.1} parent=15 // pred_check
          %p169 = pneg %p59
        $region22: #{tpu_custom_call.1} parent=15 // pred_check_branch
          %171 = sbr.rel (%p169) target = $region24
        $region23: #{tpu_custom_call.1} parent=15 // pred_region
          %p172 = scmp.lt.s32.totalorder %s13, 3
          %s173 = scalar_select %p172, %s13, 3
          %s174 = smul.addr %s173, 8
          %s175 = scalar_lea.vmem %s1, %s174
        $region24: #{tpu_custom_call.1} parent=15 // pred_fallthru
          _
        // Predicated region
        $region25: #{tpu_custom_call.1} parent=15 // pred_check
          %p176 = pneg %p85
        $region26: #{tpu_custom_call.1} parent=15 // pred_check_branch
          %178 = sbr.rel (%p176) target = $region28
        $region27: #{tpu_custom_call.1} parent=15 // pred_region
          %p179 = scmp.lt.s32.totalorder %s13, 3
          %s180 = scalar_select %p179, %s13, 3
          %s181 = smul.addr %s180, 8
          %s182 = scalar_lea.vmem %s2, %s181
        $region28: #{tpu_custom_call.1} parent=15 // pred_fallthru
          _
        // Predicated region
        $region29: #{tpu_custom_call.1} parent=15 // pred_check
          %p183 = pneg %p111
        $region30: #{tpu_custom_call.1} parent=15 // pred_check_branch
          %185 = sbr.rel (%p183) target = $region32
        $region31: #{tpu_custom_call.1} parent=15 // pred_region
          %p186 = scmp.lt.s32.totalorder %s13, 3
          %s187 = scalar_select %p186, %s13, 3
          %s188 = smul.addr %s187, 8
          %s189 = scalar_lea.vmem %s3, %s188
        $region32: #{tpu_custom_call.1} parent=15 // pred_fallthru
          _
      $region16: #{tpu_custom_call.1} parent=5 // pred_fallthru
        _
      %p190 = scmp.le.s32.totalorder 1, %s13
      %p191 = scmp.lt.s32.totalorder %s13, 5
      %p192 = pnand %p190, %p191
      %p193 = pneg %p192
      // Predicated region
      $region33: #{tpu_custom_call.1} parent=5 // pred_check
        _
      $region34: #{tpu_custom_call.1} parent=5 // pred_check_branch
        %195 = sbr.rel (%p192) target = $region36
      $region35: #{tpu_custom_call.1} parent=5 // pred_region
        %s196 = ssub.s32 %s13, 1
        %p197 = scmp.lt.s32.totalorder %s18, 3
        %s198 = scalar_select %p197, %s18, 3
        %s199 = smul.addr %s198, 8
        %s200 = scalar_lea.vmem %s0, %s199
        %p201 = pneg %p39
        %p202 = pneg %p36
        %p203 = scmp.lt.s32.totalorder %s18, 3
        %s204 = scalar_select %p203, %s18, 3
        %s205 = smul.addr %s204, 8
        %s206 = scalar_lea.vmem %s1, %s205
        %p207 = pneg %p65
        %p208 = pneg %p62
        %p209 = scmp.lt.s32.totalorder %s18, 3
        %s210 = scalar_select %p209, %s18, 3
        %s211 = smul.addr %s210, 8
        %s212 = scalar_lea.vmem %s2, %s211
        %p213 = pneg %p91
        %p214 = pneg %p88
        %p215 = scmp.lt.s32.totalorder %s18, 3
        %s216 = scalar_select %p215, %s18, 3
        %s217 = smul.addr %s216, 8
        %s218 = scalar_lea.vmem %s3, %s217
        %p219 = pneg %p117
        %p220 = pneg %p114
        %p221 = pneg %p143
        %p222 = pneg %p140
        %s223 = sand.u32 %s130, 1
        %s224 = scalar_lea.sflag [#allocation3], %s223
        %s225 = sand.u32 %s130, 1
        %s226 = smul.addr %s225, 8
        %s227 = scalar_lea.vmem [#allocation2], %s226
        %p228 = scmp.lt.s32.totalorder %s18, 3
        %s229 = scalar_select %p228, %s18, 3
        %s230 = smul.addr %s229, 8
        %s231 = scalar_lea.vmem %s0, %s230
        %p232 = scmp.lt.s32.totalorder %s18, 3
        %s233 = scalar_select %p232, %s18, 3
        %s234 = smul.addr %s233, 8
        %s235 = scalar_lea.vmem %s1, %s234
        %p236 = scmp.lt.s32.totalorder %s18, 3
        %s237 = scalar_select %p236, %s18, 3
        %s238 = smul.addr %s237, 8
        %s239 = scalar_lea.vmem %s2, %s238
        %p240 = scmp.lt.s32.totalorder %s18, 3
        %s241 = scalar_select %p240, %s18, 3
        %s242 = smul.addr %s241, 8
        %s243 = scalar_lea.vmem %s3, %s242
        %v244 = vld [vmem:[%s231] sm:$0xff]
        %v245 = vld [vmem:[%s235] sm:$0xff]
        %v246 = vld [vmem:[%s239] sm:$0xff]
        %v247 = vld [vmem:[%s243] sm:$0xff]
        %v248 = vlaneseq
        %v249 = vand.u32 %v248, 127
        %vm250 = vcmp.lt.s32.totalorder %v249, 64
        %252 = vset.pattern.permute.xlu0 6
        %253 = vperm.xlu0 %252, %v247
        %v254 = vpop.permute.xlu0 %253
        %v256 = vmul.f32 %v244, %v254
        %257 = vrot.lane.b32.xlu0 %v244, 3
        %v258 = vpop.permute.xlu0 %257
        %260 = vset.pattern.permute.xlu0 0
        %261 = vperm.xlu0 %260, %v246
        %v262 = vpop.permute.xlu0 %261
        %v264 = vmul.f32 %v258, %v262
        %266 = vset.pattern.permute.xlu0 0
        %267 = vperm.xlu0 %266, %v245
        %v268 = vpop.permute.xlu0 %267
        %v270 = vmul.f32 %v258, %v268
        %271 = vrot.lane.b32.xlu0 %v244, 2
        %v272 = vpop.permute.xlu0 %271
        %273 = vset.pattern.permute.xlu0 1
        %274 = vperm.xlu0 %273, %v246
        %v275 = vpop.permute.xlu0 %274
        %v277 = vmul.f32 %v272, %v275
        %278 = vset.pattern.permute.xlu0 1
        %279 = vperm.xlu0 %278, %v245
        %v280 = vpop.permute.xlu0 %279
        %v282 = vmul.f32 %v272, %v280
        %v283 = vadd.f32 %v264, %v277
        %v284 = vadd.f32 %v270, %v282
        %285 = vrot.lane.b32.xlu0 %v244, 1
        %v286 = vpop.permute.xlu0 %285
        %287 = vset.pattern.permute.xlu0 2
        %288 = vperm.xlu0 %287, %v246
        %v289 = vpop.permute.xlu0 %288
        %v291 = vmul.f32 %v286, %v289
        %292 = vset.pattern.permute.xlu0 2
        %293 = vperm.xlu0 %292, %v245
        %v294 = vpop.permute.xlu0 %293
        %v296 = vmul.f32 %v286, %v294
        %v297 = vadd.f32 %v283, %v291
        %v298 = vadd.f32 %v284, %v296
        %299 = vset.pattern.permute.xlu0 3
        %300 = vperm.xlu0 %299, %v246
        %v301 = vpop.permute.xlu0 %300
        %v303 = vmul.f32 %v244, %v301
        %304 = vset.pattern.permute.xlu0 3
        %305 = vperm.xlu0 %304, %v245
        %v306 = vpop.permute.xlu0 %305
        %v308 = vmul.f32 %v244, %v306
        %v309 = vadd.f32 %v297, %v303
        %v310 = vadd.f32 %v298, %v308
        %311 = vset.pattern.permute.xlu0 5
        %312 = vperm.xlu0 %311, %v247
        %v313 = vpop.permute.xlu0 %312
        %v315 = vmul.f32 %v313, %v309
        %v316 = vadd.f32 %v256, %v315
        %v317 = vsel %vm250, %v310, 0.0
        %318 = vrot.lane.b32.xlu0 %v317, 6
        %v319 = vpop.permute.xlu0 %318
        %v320 = vmul.f32 %v319, %v262
        %v321 = vmul.f32 %v319, %v268
        %322 = vrot.lane.b32.xlu0 %v317, 4
        %v323 = vpop.permute.xlu0 %322
        %v324 = vmul.f32 %v323, %v275
        %v325 = vmul.f32 %v323, %v280
        %v326 = vadd.f32 %v320, %v324
        %v327 = vadd.f32 %v321, %v325
        %328 = vrot.lane.b32.xlu0 %v317, 2
        %v329 = vpop.permute.xlu0 %328
        %v330 = vmul.f32 %v329, %v289
        %v331 = vmul.f32 %v329, %v294
        %v332 = vadd.f32 %v326, %v330
        %v333 = vadd.f32 %v327, %v331
        %v334 = vmul.f32 %v317, %v301
        %v335 = vmul.f32 %v317, %v306
        %v336 = vadd.f32 %v332, %v334
        %v337 = vadd.f32 %v333, %v335
        %338 = vset.pattern.permute.xlu0 4
        %339 = vperm.xlu0 %338, %v247
        %v340 = vpop.permute.xlu0 %339
        %v342 = vmul.f32 %v340, %v336
        %v343 = vadd.f32 %v316, %v342
        %v344 = vsel %vm250, %v337, 0.0
        %345 = vrot.lane.b32.xlu0 %v344, 12
        %v346 = vpop.permute.xlu0 %345
        %v347 = vmul.f32 %v346, %v262
        %v348 = vmul.f32 %v346, %v268
        %349 = vrot.lane.b32.xlu0 %v344, 8
        %v350 = vpop.permute.xlu0 %349
        %v351 = vmul.f32 %v350, %v275
        %v352 = vmul.f32 %v350, %v280
        %v353 = vadd.f32 %v347, %v351
        %v354 = vadd.f32 %v348, %v352
        %355 = vrot.lane.b32.xlu0 %v344, 4
        %v356 = vpop.permute.xlu0 %355
        %v357 = vmul.f32 %v356, %v289
        %v358 = vmul.f32 %v356, %v294
        %v359 = vadd.f32 %v353, %v357
        %v360 = vadd.f32 %v354, %v358
        %v361 = vmul.f32 %v344, %v301
        %v362 = vmul.f32 %v344, %v306
        %v363 = vadd.f32 %v359, %v361
        %v364 = vadd.f32 %v360, %v362
        %365 = vset.pattern.permute.xlu0 3
        %366 = vperm.xlu0 %365, %v247
        %v367 = vpop.permute.xlu0 %366
        %v369 = vmul.f32 %v367, %v363
        %v370 = vadd.f32 %v343, %v369
        %v371 = vsel %vm250, %v364, 0.0
        %372 = vrot.lane.b32.xlu0 %v371, 24
        %v373 = vpop.permute.xlu0 %372
        %v374 = vmul.f32 %v373, %v262
        %v375 = vmul.f32 %v373, %v268
        %376 = vrot.lane.b32.xlu0 %v371, 16
        %v377 = vpop.permute.xlu0 %376
        %v378 = vmul.f32 %v377, %v275
        %v379 = vmul.f32 %v377, %v280
        %v380 = vadd.f32 %v374, %v378
        %v381 = vadd.f32 %v375, %v379
        %382 = vrot.lane.b32.xlu0 %v371, 8
        %v383 = vpop.permute.xlu0 %382
        %v384 = vmul.f32 %v383, %v289
        %v385 = vmul.f32 %v383, %v294
        %v386 = vadd.f32 %v380, %v384
        %v387 = vadd.f32 %v381, %v385
        %v388 = vmul.f32 %v371, %v301
        %v389 = vmul.f32 %v371, %v306
        %v390 = vadd.f32 %v386, %v388
        %v391 = vadd.f32 %v387, %v389
        %392 = vset.pattern.permute.xlu0 2
        %393 = vperm.xlu0 %392, %v247
        %v394 = vpop.permute.xlu0 %393
        %v396 = vmul.f32 %v394, %v390
        %v397 = vadd.f32 %v370, %v396
        %v398 = vsel %vm250, %v391, 0.0
        %399 = vrot.lane.b32.xlu0 %v398, 48
        %v400 = vpop.permute.xlu0 %399
        %v401 = vmul.f32 %v400, %v262
        %v402 = vmul.f32 %v400, %v268
        %403 = vrot.lane.b32.xlu0 %v398, 32
        %v404 = vpop.permute.xlu0 %403
        %v405 = vmul.f32 %v404, %v275
        %v406 = vmul.f32 %v404, %v280
        %v407 = vadd.f32 %v401, %v405
        %v408 = vadd.f32 %v402, %v406
        %409 = vrot.lane.b32.xlu0 %v398, 16
        %v410 = vpop.permute.xlu0 %409
        %v411 = vmul.f32 %v410, %v289
        %v412 = vmul.f32 %v410, %v294
        %v413 = vadd.f32 %v407, %v411
        %v414 = vadd.f32 %v408, %v412
        %v415 = vmul.f32 %v398, %v301
        %v416 = vmul.f32 %v398, %v306
        %v417 = vadd.f32 %v413, %v415
        %v418 = vadd.f32 %v414, %v416
        %419 = vset.pattern.permute.xlu0 1
        %420 = vperm.xlu0 %419, %v247
        %v421 = vpop.permute.xlu0 %420
        %v423 = vmul.f32 %v421, %v417
        %v424 = vadd.f32 %v397, %v423
        %425 = vset.pattern.permute.xlu0 0
        %426 = vperm.xlu0 %425, %v247
        %v427 = vpop.permute.xlu0 %426
        %v429 = vmul.f32 %v427, %v418
        %v430 = vadd.f32 %v424, %v429
        %v431 = vmul.f32 %v430, 0.5
        %v432 = vmul.f32 %v430, 0.70710677
        %v433 = verf.f32.pop %v432
        %v434 = vadd.f32 %v433, 1.0
        %v435 = vmul.f32 %v431, %v434
        %436 = vst [vmem:[%s227] sm:$0xff] %v435
        %s437 = sand.u32 %s130, 1
        %s438 = scalar_lea.sflag [#allocation3], %s437
        %s439 = sand.u32 %s130, 1
        %s440 = smul.addr %s439, 8
        %s441 = scalar_lea.vmem [#allocation2], %s440
        // Predicated region
        $region37: #{tpu_custom_call.1} parent=35 // pred_check
          %p442 = pneg %p140
        $region38: #{tpu_custom_call.1} parent=35 // pred_check_branch
          %444 = sbr.rel (%p442) target = $region40
        $region39: #{tpu_custom_call.1} parent=35 // pred_region
          %s446 = ssub.s32 128, 128
          %447 = vsyncadd %s438, %s446
          %s448 = smul.addr %s18, 128
          %s449 = scalar_lea.hbm %s4, %s448
          %s451 = sshll.u32 %s441, 4
          %s452 = int_to_ptr.vmem [resolvable:$true] %s451
          %454 = dma.vmem_to_hbm [thread:$0]  %s452, 128, %s449, %s438
        $region40: #{tpu_custom_call.1} parent=35 // pred_fallthru
          _
      $region36: #{tpu_custom_call.1} parent=5 // pred_fallthru
        _
      %p455 = scmp.le.s32.totalorder 2, %s13
      // Predicated region
      $region41: #{tpu_custom_call.1} parent=5 // pred_check
        %p456 = pneg %p455
      $region42: #{tpu_custom_call.1} parent=5 // pred_check_branch
        %458 = sbr.rel (%p456) target = $region44
      $region43: #{tpu_custom_call.1} parent=5 // pred_region
        %s459 = ssub.s32 %s13, 2
        // Predicated region
        $region45: #{tpu_custom_call.1} parent=43 // pred_check
          %p460 = pneg %p146
        $region46: #{tpu_custom_call.1} parent=43 // pred_check_branch
          %462 = sbr.rel (%p460) target = $region48
        $region47: #{tpu_custom_call.1} parent=43 // pred_region
          %s463 = sand.u32 %s131, 1
          %s464 = scalar_lea.sflag [#allocation3], %s463
          %s465 = sand.u32 %s131, 1
          %s466 = smul.addr %s465, 8
          %s467 = scalar_lea.vmem [#allocation2], %s466
          %468 = dma.done %s464, 128
        $region48: #{tpu_custom_call.1} parent=43 // pred_fallthru
          _
      $region44: #{tpu_custom_call.1} parent=5 // pred_fallthru
        _
    $region6: #{tpu_custom_call.1} parent=1 // loop_footer
      %s17 = sadd.s32 1, %s13
    $region7: #{tpu_custom_call.1} parent=1 // loop_footer_branch
      %12 = sbr.rel target = $region3
    $region8: #{tpu_custom_call.1} parent=1 // loop_exit
      _
    %469 = vsyncpa [#allocation3], 1
    %s470 = scalar_lea.sflag [#allocation3], 1
    %471 = vsyncpa %s470, 1

</llo_original>
